<compile_context>
chip_gen: v5e
topology: v5e:2x2
jax: 0.10.0
libtpu: 0.0.40
codegen_flags: <defaults>
</compile_context>

<pallas_src>
import math

import jax
import jax.numpy as jnp
from jax.experimental import pallas as pl
from jax.experimental.pallas import tpu as pltpu

_LANE = 128

# generation -> (block_bytes per buffer @ f32 compute width, scoped vmem_limit_bytes)
_GEN_CFG = {
    7: (4 << 20, 48 << 20),   # 64 MiB physical VMEM: 2x(in+out) 4 MiB bufs + temps < 48 MiB
    6: (4 << 20, 64 << 20),   # 128 MiB physical; raise above the 32 MiB default scoped limit
    5: (2 << 20, 64 << 20),   # v5e default scoped limit is 16 MiB; raise for f32 temporaries
}
_DEFAULT_CFG = (2 << 20, None)


def _tpu_generation():
    """Best-effort TPU generation detection from the device kind string."""
    try:
        kind = jax.devices()[0].device_kind.lower()
    except Exception:  # pragma: no cover - non-TPU / query failure
        return 0
    if "v7" in kind or "tpu7" in kind:
        return 7
    if "v6" in kind:
        return 6
    if "v5e" in kind or ("v5" in kind and "lite" in kind):
        return 5
    return 0


def _cond_nlin_kernel(x_ref, o_ref):
    # x is interleaved (re, im, re, im, ...) along the 128-lane axis.
    x = x_ref[...].astype(jnp.float32)          # f32 compute (matters for bf16 on v5e)
    s = x * x                                    # per-lane square (VPU)
    # Partner lane is (i ^ 1): even lanes need s[i+1], odd lanes need s[i-1].
    nxt = pltpu.roll(s, 127, 1)                  # == jnp.roll(s, -1, axis=1): s[i+1]
    prv = pltpu.roll(s, 1, 1)                    # == jnp.roll(s, +1, axis=1): s[i-1]
    lane = jax.lax.broadcasted_iota(jnp.int32, (1, _LANE), 1)   # (1,128), broadcasts
    amp = s + jnp.where((lane & 1) == 0, nxt, prv)              # re^2 + im^2 on both lanes
    o_ref[...] = (amp * x).astype(o_ref.dtype)


def _run_kernel_2d(x2d, block_rows_target, vmem_limit, use_core_parallel):
    rows = x2d.shape[0]
    # Full-array block for small inputs (allowed regardless of the (8,128) rule);
    # otherwise the generation-sized block with a ragged (masked) trailing block.
    block_rows = rows if rows < block_rows_target else block_rows_target
    grid_steps = pl.cdiv(rows, block_rows)

    if use_core_parallel and grid_steps >= 2:
        dim_sem = (pltpu.CORE_PARALLEL,)         # shard grid over v7x's 2 TensorCores
    else:
        dim_sem = ("parallel",)

    blk = pl.BlockSpec((block_rows, _LANE), lambda i: (i, 0))
    return pl.pallas_call(
        _cond_nlin_kernel,
        out_shape=jax.ShapeDtypeStruct((rows, _LANE), x2d.dtype),
        grid_spec=pltpu.PrefetchScalarGridSpec(
            num_scalar_prefetch=0,
            grid=(grid_steps,),
            in_specs=[blk],
            out_specs=blk,
        ),
        compiler_params=pltpu.CompilerParams(
            dimension_semantics=dim_sem,
            vmem_limit_bytes=vmem_limit,
        ),
    )(x2d)


def cond_nlin_core(x, h_0=None):
    """Pallas implementation of CondNlinCore.forward (h_0 is unused, as in torch)."""
    orig_shape = x.shape
    orig_dtype = x.dtype
    assert orig_shape[-1] == 2, "last axis must be (real, imag)"

    n_total = math.prod(orig_shape)
    if n_total == 0:
        return x

    gen = _tpu_generation()
    block_bytes, vmem_limit = _GEN_CFG.get(gen, _DEFAULT_CFG)
    # Size blocks from the in-kernel COMPUTE itemsize (f32 = 4 B), not storage dtype.
    block_rows_target = max(8, block_bytes // (_LANE * 4))

    xf = x.reshape(-1)                           # interleaved re/im (contiguous view)
    n_head = (n_total // _LANE) * _LANE          # 128-aligned head (always pair-aligned)
    n_tail = n_total - n_head

    pieces = []
    if n_head:
        head = xf if n_tail == 0 else xf[:n_head]
        out_head = _run_kernel_2d(
            head.reshape(n_head // _LANE, _LANE),
            block_rows_target,
            vmem_limit,
            use_core_parallel=(gen == 7),
        )
        pieces.append(out_head.reshape(-1))
    if n_tail:
        # Tiny (<128 elem) misaligned tail: 3-line jnp reference, no whole-array pad.
        t = xf[n_head:].reshape(-1, 2).astype(jnp.float32)
        amp = t[:, 0] ** 2 + t[:, 1] ** 2
        pieces.append((amp[:, None] * t).astype(orig_dtype).reshape(-1))

    out = pieces[0] if len(pieces) == 1 else jnp.concatenate(pieces)
    return out.reshape(orig_shape)


def _reference(x):
    xf = x.astype(jnp.float32)
    amp = xf[..., 0] ** 2 + xf[..., 1] ** 2
    return (amp[..., None] * xf).astype(x.dtype)


if __name__ == "__main__":
    key = jax.random.PRNGKey(0)

    # batch=2, seq=8, n_channels=4, complex=2 -> exactly 128 elems (single tiny block).
    x1 = jax.random.normal(key, (2, 8, 4, 2), dtype=jnp.float32)
    out1 = jax.block_until_ready(cond_nlin_core(x1))
    ref1 = _reference(x1)
    assert out1.shape == ref1.shape and out1.dtype == ref1.dtype
    assert jnp.allclose(out1, ref1, atol=1e-5, rtol=1e-5)

    # Lane-aligned larger shape: 512 rows, single full-array block, no pad / no slice.
    x2 = jax.random.normal(jax.random.PRNGKey(1), (2, 256, 64, 2), dtype=jnp.float32)
    out2 = jax.block_until_ready(cond_nlin_core(x2))
    ref2 = _reference(x2)
    assert out2.shape == ref2.shape and out2.dtype == ref2.dtype
    assert jnp.allclose(out2, ref2, atol=1e-5, rtol=1e-5)

    # Misaligned shape (1036 elems): 128-aligned head via kernel + 12-elem jnp tail.
    x3 = jax.random.normal(jax.random.PRNGKey(2), (2, 37, 7, 2), dtype=jnp.float32)
    out3 = jax.block_until_ready(cond_nlin_core(x3))
    ref3 = _reference(x3)
    assert out3.shape == ref3.shape and out3.dtype == ref3.dtype
    assert jnp.allclose(out3, ref3, atol=1e-5, rtol=1e-5)

    # bf16 input (kernel computes in f32; slightly more accurate than native bf16 torch).
    x4 = jax.random.normal(jax.random.PRNGKey(3), (2, 8, 4, 2), dtype=jnp.bfloat16)
    out4 = jax.block_until_ready(cond_nlin_core(x4))
    ref4 = _reference(x4)
    assert out4.shape == ref4.shape and out4.dtype == ref4.dtype
    assert jnp.allclose(out4.astype(jnp.float32), ref4.astype(jnp.float32),
                        atol=3e-2, rtol=3e-2)

    print("KERNEL_OK")
</pallas_src>

<mosaic_0001>
module attributes {stable_mosaic.version = 11 : i64} {
  func.func @_cond_nlin_kernel(%arg0: i32, %arg1: memref<1x128xf32, #tpu.memory_space<vmem>>, %arg2: memref<1x128xf32, #tpu.memory_space<vmem>>) attributes {dimension_semantics = [#tpu.dimension_semantics<parallel>], iteration_bounds = array<i64: 1>, scalar_prefetch = 0 : i64, scratch_operands = 0 : i64, tpu.core_type = #tpu.core_type<tc>, window_params = [{transform_indices = @transform_0, window_bounds = array<i64: 1, 128>}, {transform_indices = @transform_1, window_bounds = array<i64: 1, 128>}]} {
    %c0 = arith.constant 0 : index
    %c0_0 = arith.constant 0 : index
    %0 = vector.load %arg1[%c0, %c0_0] : memref<1x128xf32, #tpu.memory_space<vmem>>, vector<1x128xf32>
    %1 = arith.mulf %0, %0 : vector<1x128xf32>
    %c127_i32 = arith.constant 127 : i32
    %2 = tpu.dynamic_rotate %1 by %c127_i32 dim 1 : vector<1x128xf32>, i32 -> vector<1x128xf32>
    %c1_i32 = arith.constant 1 : i32
    %3 = tpu.dynamic_rotate %1 by %c1_i32 dim 1 : vector<1x128xf32>, i32 -> vector<1x128xf32>
    %4 = tpu.iota {dimensions = array<i32: 1>} : vector<1x128xi32>
    %c1_i32_1 = arith.constant 1 : i32
    %5 = vector.broadcast %c1_i32_1 : i32 to vector<1x128xi32>
    %6 = arith.andi %4, %5 : vector<1x128xi32>
    %c0_i32 = arith.constant 0 : i32
    %7 = vector.broadcast %c0_i32 : i32 to vector<1x128xi32>
    %8 = arith.cmpi eq, %6, %7 : vector<1x128xi32>
    %9 = arith.select %8, %2, %3 : vector<1x128xi1>, vector<1x128xf32>
    %10 = arith.addf %1, %9 : vector<1x128xf32>
    %11 = arith.mulf %10, %0 : vector<1x128xf32>
    %c0_2 = arith.constant 0 : index
    %c0_3 = arith.constant 0 : index
    %12 = vector.load %arg2[%c0_2, %c0_3] : memref<1x128xf32, #tpu.memory_space<vmem>>, vector<1x128xf32>
    tpu.vector_store %arg2[%c0_2, %c0_3], %11 {strides = array<i32>} : memref<1x128xf32, #tpu.memory_space<vmem>>, vector<1x128xf32>,
    return
  }
  func.func @transform_0(%arg0: i32) -> (i32, i32) {
    %c0_i32 = arith.constant 0 : i32
    %c0_i32_0 = arith.constant 0 : i32
    return %arg0, %c0_i32 : i32, i32
  }
  func.func @transform_1(%arg0: i32) -> (i32, i32) {
    %c0_i32 = arith.constant 0 : i32
    %c0_i32_0 = arith.constant 0 : i32
    return %arg0, %c0_i32 : i32, i32
  }
}

</mosaic_0001>

<llo_original>
// kernel: tpu_custom_call.1
$region0: #{tpu_custom_call.1}
  #allocation0 [shape = 'u32[]', space=smem, size = 0x4, offset = 0x4, fixed_abs, tag = 'smem constant byte address 0x4 - core index']
  #allocation1 [shape = 'u32[72,128]{1,0:T(1,128)}', space=vmem, size = 0x9000, scoped, tag = 'internal scratch']
  %s0 = inlined_call_operand.hbm [shape: f32[1,128], index: 0, kind: input, shape index: {}]
  %s1 = inlined_call_operand.hbm [shape: f32[1,128], index: 1, kind: output, shape index: {}]
  %s2 = sld [smem:[#allocation0]]
  $region18: #{tpu_custom_call.1} parent=0
    _
  %s4 = ssub.s32 1, %s2
  %s5 = scalar_select 0, %s4, %s2
  $region1: #{tpu_custom_call.1} parent=0
    #allocation2 [shape = 'u8[512]{0}', space=vmem, size = 0x400, scoped, tag = 'input window, operand 0, single buffered']
    #allocation3 [shape = 's32[1]{0}', space=sflag, size = 0x4, scoped, tag = 'scoped memory for tpu_custom_call.1']
    #allocation4 [shape = 's32[1]{0}', space=sflag, size = 0x4, scoped, tag = 'scoped memory for tpu_custom_call.1']
    #allocation5 [shape = 'u8[512]{0}', space=vmem, size = 0x400, scoped, tag = 'output window, operand 0, single buffered']
    %6 = vsyncpa [#allocation3], 0
    %7 = vsyncpa [#allocation4], 0
    // Predicated region
    $region2: #{tpu_custom_call.1} parent=1 // pred_check
      _
    $region3: #{tpu_custom_call.1} parent=1 // pred_check_branch
      %9 = sbr.rel (0) target = $region5
    $region4: #{tpu_custom_call.1} parent=1 // pred_region
      %11 = vsyncadd [#allocation3], 0
      %s13 = sshll.u32 %s0, 4
      %s14 = int_to_ptr.hbm [resolvable:$true] %s13
      %s15 = sshll.u32 [#allocation2], 4
      %s16 = int_to_ptr.vmem [resolvable:$true] %s15
      %18 = dma.hbm_to_vmem [thread:$0]  %s14, 16, %s16, [#allocation3]
    $region5: #{tpu_custom_call.1} parent=1 // pred_fallthru
      _
    // Predicated region
    $region6: #{tpu_custom_call.1} parent=1 // pred_check
      _
    $region7: #{tpu_custom_call.1} parent=1 // pred_check_branch
      %20 = sbr.rel (0) target = $region9
    $region8: #{tpu_custom_call.1} parent=1 // pred_region
      %22 = dma.done [#allocation3], 16
    $region9: #{tpu_custom_call.1} parent=1 // pred_fallthru
      _
    %v23 = vld [vmem:[#allocation2] sm:$0x1]
    %v24 = vmul.f32 %v23, %v23
    %25 = vrot.lane.b32.xlu0 %v24, 127
    %v26 = vpop.permute.xlu0 %25
    %27 = vrot.lane.b32.xlu0 %v24, 1
    %v28 = vpop.permute.xlu0 %27
    %v29 = vlaneseq
    %v30 = vand.u32 %v29, 127
    %v31 = vand.u32 %v30, 1
    %vm32 = vcmp.eq.s32.totalorder %v31, 0
    %v33 = vsel %vm32, %v26, %v28
    %v34 = vadd.f32 %v24, %v33
    %v35 = vmul.f32 %v34, %v23
    %36 = vst [vmem:[#allocation5] sm:$0x1] %v35
    // Predicated region
    $region10: #{tpu_custom_call.1} parent=1 // pred_check
      _
    $region11: #{tpu_custom_call.1} parent=1 // pred_check_branch
      %38 = sbr.rel (0) target = $region13
    $region12: #{tpu_custom_call.1} parent=1 // pred_region
      %40 = vsyncadd [#allocation4], 0
      %s42 = sshll.u32 [#allocation5], 4
      %s43 = int_to_ptr.vmem [resolvable:$true] %s42
      %s44 = sshll.u32 %s1, 4
      %s45 = int_to_ptr.hbm [resolvable:$true] %s44
      %47 = dma.vmem_to_hbm [thread:$0]  %s43, 16, %s45, [#allocation4]
    $region13: #{tpu_custom_call.1} parent=1 // pred_fallthru
      _
    // Predicated region
    $region14: #{tpu_custom_call.1} parent=1 // pred_check
      _
    $region15: #{tpu_custom_call.1} parent=1 // pred_check_branch
      %49 = sbr.rel (0) target = $region17
    $region16: #{tpu_custom_call.1} parent=1 // pred_region
      %51 = dma.done [#allocation4], 16
    $region17: #{tpu_custom_call.1} parent=1 // pred_fallthru
      _
    %52 = vsyncpa [#allocation3], 1
    %53 = vsyncpa [#allocation4], 1

</llo_original>
